<compile_context>
chip_gen: v6e
topology: v6e:2x2x1
jax: 0.10.0
libtpu: 0.0.40
codegen_flags: <defaults>
</compile_context>

<pallas_src>
import functools

import jax
import jax.numpy as jnp
from jax.experimental import pallas as pl
from jax.experimental.pallas import tpu as pltpu


_LANE = 128
_VMEM_LIMIT = 48 * 1024 * 1024     # <= ~48 MiB: portable across v5e/v6e/v7x


def _round_up(x, m):
    return (x + m - 1) // m * m


# ----------------------------------------------------------------------------
# Pallas kernel 1: fused (temporal + spatial) conv3d as one channel-first
# matmul + bias + ReLU.
#   o[2C, tm] = relu(W[2C, K] @ P[K, tm] + b[2C, 1])
# ----------------------------------------------------------------------------
def _conv_relu_kernel(p_ref, w_ref, b_ref, o_ref):
    acc = jnp.dot(w_ref[...], p_ref[...], preferred_element_type=jnp.float32)
    o_ref[...] = jnp.maximum(acc + b_ref[...], 0.0).astype(o_ref.dtype)


def fused_conv3d_relu(patches_cf, w_packed, b_packed, *, tm):
    """patches_cf: (B, K, Mp) bf16; w_packed: (2C, K) bf16; b_packed: (2C, 1) f32.

    Returns relu(w_packed @ patches + b), shape (B, 2C, Mp), f32.
    Mp must be a multiple of tm; tm a multiple of 128 (lane-dense output).
    """
    B, K, Mp = patches_cf.shape
    N = w_packed.shape[0]
    assert Mp % tm == 0 and tm % _LANE == 0
    return pl.pallas_call(
        _conv_relu_kernel,
        out_shape=jax.ShapeDtypeStruct((B, N, Mp), jnp.float32),
        grid=(B, Mp // tm),
        in_specs=[
            pl.BlockSpec((None, K, tm), lambda b, m: (b, 0, m)),
            pl.BlockSpec((N, K), lambda b, m: (0, 0)),
            pl.BlockSpec((N, 1), lambda b, m: (0, 0)),
        ],
        out_specs=pl.BlockSpec((None, N, tm), lambda b, m: (b, 0, m)),
        compiler_params=pltpu.CompilerParams(
            dimension_semantics=("parallel", "parallel"),
            vmem_limit_bytes=_VMEM_LIMIT),
    )(patches_cf, w_packed, b_packed)


# ----------------------------------------------------------------------------
# Pallas kernel 2: broadcast attention fuse (channel-first, per-batch grid)
#   out[c, t, hw] = att_t[c, t, 1] * att_s[c, 1, hw] * (x_t + x_s)[c, t, hw]
# ----------------------------------------------------------------------------
def _attn_fuse_kernel(x_ref, at_ref, as_ref, o_ref):
    c = o_ref.shape[0]
    x = x_ref[...]                               # (2C, T, HW)  ->  [x_t ; x_s]
    att = at_ref[...] * as_ref[...]              # (C,T,1)*(C,1,HW) -> (C,T,HW)
    o_ref[...] = (att * (x[:c] + x[c:])).astype(o_ref.dtype)


def attn_fuse(x_pack, att_t, att_s):
    """x_pack: (B, 2C, T, HW) f32; att_t: (B, C, T, 1); att_s: (B, C, 1, HW)."""
    B, N2, T, HW = x_pack.shape
    C = N2 // 2
    return pl.pallas_call(
        _attn_fuse_kernel,
        out_shape=jax.ShapeDtypeStruct((B, C, T, HW), jnp.float32),
        grid=(B,),
        in_specs=[
            pl.BlockSpec((None, N2, T, HW), lambda b: (b, 0, 0, 0)),
            pl.BlockSpec((None, C, T, 1), lambda b: (b, 0, 0, 0)),
            pl.BlockSpec((None, C, 1, HW), lambda b: (b, 0, 0, 0)),
        ],
        out_specs=pl.BlockSpec((None, C, T, HW), lambda b: (b, 0, 0, 0)),
        compiler_params=pltpu.CompilerParams(
            dimension_semantics=("parallel",),
            vmem_limit_bytes=_VMEM_LIMIT),
    )(x_pack, att_t, att_s)


# ----------------------------------------------------------------------------
# Glue: channel-first im2col, softmax helper, wrapper
# ----------------------------------------------------------------------------
def im2col_3d_cf(x, ksize=3, pad=1):
    """x: (B, Cin, T, H, W) -> channel-first patches (B, Cin*k^3, T*H*W).

    Patch rows (dim 1) ordered (c_in, kd, kh, kw), matching a torch Conv3d
    weight reshaped to (C_out, C_in*k^3).  stride=1, dilation=1.
    """
    B, C, T, H, W = x.shape
    xp = jnp.pad(x, ((0, 0), (0, 0), (pad, pad), (pad, pad), (pad, pad)))
    cols = []
    for dt in range(ksize):
        for dh in range(ksize):
            for dw in range(ksize):
                cols.append(xp[:, :, dt:dt + T, dh:dh + H, dw:dw + W])
    col = jnp.stack(cols, axis=2)                 # (B, C, k^3, T, H, W)
    return col.reshape(B, C * ksize ** 3, T * H * W)


def _group_softmax(logits):
    # k=1: softmax over the channel axis; sigmoid if it has size 1 (matches
    # the SoftMax module semantics).
    if logits.shape[1] > 1:
        return jax.nn.softmax(logits, axis=1)
    return jax.nn.sigmoid(logits)


@functools.partial(jax.jit, static_argnames=("ksize", "pad"))
def attention_spatiotemporal_block(x, params, ksize=3, pad=1):
    """x: (B, C_in, T, H, W) NCDHW -> (B, C_out, T, H, W) NCDHW (k=1)."""
    B, Cin, T, H, W = x.shape
    Cout = params["w_conv_t"].shape[0]
    HW = H * W
    THW = T * HW

    # --- fused conv3d (temporal + spatial) via ONE channel-first matmul ------
    patches = im2col_3d_cf(x, ksize=ksize, pad=pad)            # (B, K, THW)
    K = patches.shape[1]

    tm = min(2048, _round_up(THW, _LANE))                      # big lane-dense tile
    THW_pad = _round_up(THW, tm)
    if THW_pad != THW:
        patches = jnp.pad(patches, ((0, 0), (0, 0), (0, THW_pad - THW)))

    # bf16 MXU operands, f32 accumulation (halves dominant HBM read).
    patches = patches.astype(jnp.bfloat16)
    w_packed = jnp.concatenate(
        [params["w_conv_t"].reshape(Cout, K),
         params["w_conv_s"].reshape(Cout, K)], axis=0).astype(jnp.bfloat16)
    b_packed = jnp.concatenate(
        [params["b_conv_t"], params["b_conv_s"]])[:, None].astype(jnp.float32)

    conv = fused_conv3d_relu(patches, w_packed, b_packed, tm=tm)  # (B, 2C, THW_pad)
    if THW_pad != THW:
        conv = conv[:, :, :THW]
    x_pack = conv.reshape(B, 2 * Cout, T, HW)                  # [x_t ; x_s]
    x_t = x_pack[:, :Cout]
    x_s = x_pack[:, Cout:]

    # --- adaptive avg pools + 1x1x1 fc + channel softmax (tiny; plain JAX) ---
    pool_t = jnp.mean(x_t, axis=3)                             # (B, C, T)
    pool_s = jnp.mean(x_s, axis=2)                             # (B, C, HW)
    wt = params["w_fc_t"].reshape(Cout, Cout)
    ws = params["w_fc_s"].reshape(Cout, Cout)
    logit_t = jnp.einsum("oc,bct->bot", wt, pool_t) + params["b_fc_t"][None, :, None]
    logit_s = jnp.einsum("oc,bcs->bos", ws, pool_s) + params["b_fc_s"][None, :, None]
    att_t = _group_softmax(logit_t)[:, :, :, None]             # (B, C, T, 1)
    att_s = _group_softmax(logit_s)[:, :, None, :]             # (B, C, 1, HW)

    # --- fused broadcast attention multiply (Pallas, per-batch grid) ---------
    out = attn_fuse(x_pack, att_t, att_s)                      # (B, C, T, HW)
    return out.reshape(B, Cout, T, H, W)                       # no transpose needed


# ----------------------------------------------------------------------------
# Pure-JAX reference (mirrors the PyTorch forward) for validation
# ----------------------------------------------------------------------------
def reference(x, p):
    Cout = p["w_conv_t"].shape[0]
    dn = ("NCDHW", "OIDHW", "NCDHW")

    def conv(inp, w, b):
        y = jax.lax.conv_general_dilated(
            inp, w, window_strides=(1, 1, 1), padding=[(1, 1)] * 3,
            dimension_numbers=dn)
        return y + b[None, :, None, None, None]

    def group_softmax(a):   # softmax over channels (k=1); sigmoid if size 1
        return jax.nn.softmax(a, axis=1) if a.shape[1] > 1 else jax.nn.sigmoid(a)

    x_t = jax.nn.relu(conv(x, p["w_conv_t"], p["b_conv_t"]))
    x_s = jax.nn.relu(conv(x, p["w_conv_s"], p["b_conv_s"]))

    att_t = jnp.mean(x_t, axis=(3, 4), keepdims=True)            # (B,C,T,1,1)
    att_t = (jnp.einsum("oc,bctyz->botyz", p["w_fc_t"].reshape(Cout, Cout), att_t)
             + p["b_fc_t"][None, :, None, None, None])
    att_t = group_softmax(att_t)

    att_s = jnp.mean(x_s, axis=2, keepdims=True)                 # (B,C,1,H,W)
    att_s = (jnp.einsum("oc,bcthw->bothw", p["w_fc_s"].reshape(Cout, Cout), att_s)
             + p["b_fc_s"][None, :, None, None, None])
    att_s = group_softmax(att_s)

    return (att_t * att_s) * (x_s + x_t)


# ----------------------------------------------------------------------------
if __name__ == "__main__":
    key = jax.random.PRNGKey(0)
    B, Cin, T, H, W = 2, 4, 4, 8, 8
    Cout, K = 16, 3                              # inner_channels=16, kernel=3
    keys = jax.random.split(key, 9)

    x = jax.random.normal(keys[0], (B, Cin, T, H, W), jnp.float32)
    params = dict(
        w_conv_t=0.1 * jax.random.normal(keys[1], (Cout, Cin, K, K, K), jnp.float32),
        b_conv_t=0.1 * jax.random.normal(keys[2], (Cout,), jnp.float32),
        w_conv_s=0.1 * jax.random.normal(keys[3], (Cout, Cin, K, K, K), jnp.float32),
        b_conv_s=0.1 * jax.random.normal(keys[4], (Cout,), jnp.float32),
        w_fc_t=0.1 * jax.random.normal(keys[5], (Cout, Cout, 1, 1, 1), jnp.float32),
        b_fc_t=0.1 * jax.random.normal(keys[6], (Cout,), jnp.float32),
        w_fc_s=0.1 * jax.random.normal(keys[7], (Cout, Cout, 1, 1, 1), jnp.float32),
        b_fc_s=0.1 * jax.random.normal(keys[8], (Cout,), jnp.float32),
    )

    out = attention_spatiotemporal_block(x, params)
    out = jax.block_until_ready(out)
    assert out.shape == (B, Cout, T, H, W)

    ref = jax.block_until_ready(reference(x, params))
    max_err = float(jnp.max(jnp.abs(out - ref)))
    # bf16 conv operands (f32 accumulation) vs all-f32 reference: observed
    # error is O(1e-4) at these magnitudes; threshold leaves ample margin.
    assert max_err < 5e-3, f"mismatch vs reference: {max_err}"

    print("KERNEL_OK")
</pallas_src>

<mosaic_0001>
module attributes {stable_mosaic.version = 11 : i64} {
  func.func @_conv_relu_kernel(%arg0: i32, %arg1: i32, %arg2: memref<1x108x256xbf16, #tpu.memory_space<vmem>>, %arg3: memref<32x108xbf16, #tpu.memory_space<vmem>>, %arg4: memref<32x1xf32, #tpu.memory_space<vmem>>, %arg5: memref<1x32x256xf32, #tpu.memory_space<vmem>>) attributes {dimension_semantics = [#tpu.dimension_semantics<parallel>, #tpu.dimension_semantics<parallel>], iteration_bounds = array<i64: 2, 1>, scalar_prefetch = 0 : i64, scratch_operands = 0 : i64, tpu.core_type = #tpu.core_type<tc>, window_params = [{transform_indices = @transform_0, window_bounds = array<i64: 1, 108, 256>}, {pipeline_mode = #tpu.pipeline_mode<synchronous>, transform_indices = @transform_1, window_bounds = array<i64: 32, 108>}, {pipeline_mode = #tpu.pipeline_mode<synchronous>, transform_indices = @transform_2, window_bounds = array<i64: 32, 1>}, {transform_indices = @transform_3, window_bounds = array<i64: 1, 32, 256>}]} {
    %c0 = arith.constant 0 : index
    %c0_0 = arith.constant 0 : index
    %0 = vector.load %arg3[%c0, %c0_0] : memref<32x108xbf16, #tpu.memory_space<vmem>>, vector<32x108xbf16>
    %c0_1 = arith.constant 0 : index
    %c0_2 = arith.constant 0 : index
    %c0_3 = arith.constant 0 : index
    %1 = vector.load %arg2[%c0_1, %c0_2, %c0_3] : memref<1x108x256xbf16, #tpu.memory_space<vmem>>, vector<1x108x256xbf16>
    %2 = vector.shape_cast %1 : vector<1x108x256xbf16> to vector<108x256xbf16>
    %cst = arith.constant dense<0.000000e+00> : vector<32x256xf32>
    %3 = tpu.matmul %0, %2, %cst {dimension_numbers = #tpu.dot_dimension_numbers<[1], [0], [0], [1], [0, 0, 1, 1], [], []>} : vector<32x108xbf16>, vector<108x256xbf16>, vector<32x256xf32> -> vector<32x256xf32>
    %c0_4 = arith.constant 0 : index
    %c0_5 = arith.constant 0 : index
    %4 = vector.load %arg4[%c0_4, %c0_5] : memref<32x1xf32, #tpu.memory_space<vmem>>, vector<32x1xf32>
    %5 = vector.broadcast %4 : vector<32x1xf32> to vector<32x256xf32>
    %6 = arith.addf %3, %5 : vector<32x256xf32>
    %cst_6 = arith.constant 0.000000e+00 : f32
    %7 = vector.broadcast %cst_6 : f32 to vector<32x256xf32>
    %8 = arith.maximumf %6, %7 : vector<32x256xf32>
    %c0_7 = arith.constant 0 : index
    %c0_8 = arith.constant 0 : index
    %c0_9 = arith.constant 0 : index
    %9 = vector.load %arg5[%c0_7, %c0_8, %c0_9] : memref<1x32x256xf32, #tpu.memory_space<vmem>>, vector<1x32x256xf32>
    %10 = vector.shape_cast %9 : vector<1x32x256xf32> to vector<32x256xf32>
    %11 = vector.shape_cast %8 : vector<32x256xf32> to vector<1x32x256xf32>
    tpu.vector_store %arg5[%c0_7, %c0_8, %c0_9], %11 {strides = array<i32>} : memref<1x32x256xf32, #tpu.memory_space<vmem>>, vector<1x32x256xf32>,
    return
  }
  func.func @transform_0(%arg0: i32, %arg1: i32) -> (i32, i32, i32) {
    %c0_i32 = arith.constant 0 : i32
    %c0_i32_0 = arith.constant 0 : i32
    return %arg0, %c0_i32, %arg1 : i32, i32, i32
  }
  func.func @transform_1(%arg0: i32, %arg1: i32) -> (i32, i32) {
    %c0_i32 = arith.constant 0 : i32
    %c0_i32_0 = arith.constant 0 : i32
    %c0_i32_1 = arith.constant 0 : i32
    return %c0_i32, %c0_i32_0 : i32, i32
  }
  func.func @transform_2(%arg0: i32, %arg1: i32) -> (i32, i32) {
    %c0_i32 = arith.constant 0 : i32
    %c0_i32_0 = arith.constant 0 : i32
    %c0_i32_1 = arith.constant 0 : i32
    return %c0_i32, %c0_i32_0 : i32, i32
  }
  func.func @transform_3(%arg0: i32, %arg1: i32) -> (i32, i32, i32) {
    %c0_i32 = arith.constant 0 : i32
    %c0_i32_0 = arith.constant 0 : i32
    return %arg0, %c0_i32, %arg1 : i32, i32, i32
  }
}

module attributes {stable_mosaic.version = 11 : i64} {
  func.func @_attn_fuse_kernel(%arg0: i32, %arg1: memref<1x32x4x64xf32, #tpu.memory_space<vmem>>, %arg2: memref<1x16x4x1xf32, #tpu.memory_space<vmem>>, %arg3: memref<1x16x1x64xf32, #tpu.memory_space<vmem>>, %arg4: memref<1x16x4x64xf32, #tpu.memory_space<vmem>>) attributes {dimension_semantics = [#tpu.dimension_semantics<parallel>], iteration_bounds = array<i64: 2>, scalar_prefetch = 0 : i64, scratch_operands = 0 : i64, tpu.core_type = #tpu.core_type<tc>, window_params = [{transform_indices = @transform_0, window_bounds = array<i64: 1, 32, 4, 64>}, {transform_indices = @transform_1, window_bounds = array<i64: 1, 16, 4, 1>}, {transform_indices = @transform_2, window_bounds = array<i64: 1, 16, 1, 64>}, {transform_indices = @transform_3, window_bounds = array<i64: 1, 16, 4, 64>}]} {
    %c0 = arith.constant 0 : index
    %c0_0 = arith.constant 0 : index
    %c0_1 = arith.constant 0 : index
    %c0_2 = arith.constant 0 : index
    %0 = vector.load %arg1[%c0, %c0_0, %c0_1, %c0_2] : memref<1x32x4x64xf32, #tpu.memory_space<vmem>>, vector<1x32x4x64xf32>
    %1 = vector.shape_cast %0 : vector<1x32x4x64xf32> to vector<32x4x64xf32>
    %c0_3 = arith.constant 0 : index
    %c0_4 = arith.constant 0 : index
    %c0_5 = arith.constant 0 : index
    %c0_6 = arith.constant 0 : index
    %2 = vector.load %arg2[%c0_3, %c0_4, %c0_5, %c0_6] : memref<1x16x4x1xf32, #tpu.memory_space<vmem>>, vector<1x16x4x1xf32>
    %3 = vector.shape_cast %2 : vector<1x16x4x1xf32> to vector<16x4x1xf32>
    %c0_7 = arith.constant 0 : index
    %c0_8 = arith.constant 0 : index
    %c0_9 = arith.constant 0 : index
    %c0_10 = arith.constant 0 : index
    %4 = vector.load %arg3[%c0_7, %c0_8, %c0_9, %c0_10] : memref<1x16x1x64xf32, #tpu.memory_space<vmem>>, vector<1x16x1x64xf32>
    %5 = vector.shape_cast %4 : vector<1x16x1x64xf32> to vector<16x1x64xf32>
    %6 = vector.broadcast %3 : vector<16x4x1xf32> to vector<16x4x64xf32>
    %7 = vector.broadcast %5 : vector<16x1x64xf32> to vector<16x4x64xf32>
    %8 = arith.mulf %6, %7 : vector<16x4x64xf32>
    %9 = vector.extract_strided_slice %1 {offsets = [0, 0, 0], sizes = [16, 4, 64], strides = [1, 1, 1]} : vector<32x4x64xf32> to vector<16x4x64xf32>
    %10 = vector.extract_strided_slice %1 {offsets = [16, 0, 0], sizes = [16, 4, 64], strides = [1, 1, 1]} : vector<32x4x64xf32> to vector<16x4x64xf32>
    %11 = arith.addf %9, %10 : vector<16x4x64xf32>
    %12 = arith.mulf %8, %11 : vector<16x4x64xf32>
    %c0_11 = arith.constant 0 : index
    %c0_12 = arith.constant 0 : index
    %c0_13 = arith.constant 0 : index
    %c0_14 = arith.constant 0 : index
    %13 = vector.load %arg4[%c0_11, %c0_12, %c0_13, %c0_14] : memref<1x16x4x64xf32, #tpu.memory_space<vmem>>, vector<1x16x4x64xf32>
    %14 = vector.shape_cast %13 : vector<1x16x4x64xf32> to vector<16x4x64xf32>
    %15 = vector.shape_cast %12 : vector<16x4x64xf32> to vector<1x16x4x64xf32>
    tpu.vector_store %arg4[%c0_11, %c0_12, %c0_13, %c0_14], %15 {strides = array<i32>} : memref<1x16x4x64xf32, #tpu.memory_space<vmem>>, vector<1x16x4x64xf32>,
    return
  }
  func.func @transform_0(%arg0: i32) -> (i32, i32, i32, i32) {
    %c0_i32 = arith.constant 0 : i32
    %c0_i32_0 = arith.constant 0 : i32
    %c0_i32_1 = arith.constant 0 : i32
    %c0_i32_2 = arith.constant 0 : i32
    return %arg0, %c0_i32, %c0_i32_0, %c0_i32_1 : i32, i32, i32, i32
  }
  func.func @transform_1(%arg0: i32) -> (i32, i32, i32, i32) {
    %c0_i32 = arith.constant 0 : i32
    %c0_i32_0 = arith.constant 0 : i32
    %c0_i32_1 = arith.constant 0 : i32
    %c0_i32_2 = arith.constant 0 : i32
    return %arg0, %c0_i32, %c0_i32_0, %c0_i32_1 : i32, i32, i32, i32
  }
  func.func @transform_2(%arg0: i32) -> (i32, i32, i32, i32) {
    %c0_i32 = arith.constant 0 : i32
    %c0_i32_0 = arith.constant 0 : i32
    %c0_i32_1 = arith.constant 0 : i32
    %c0_i32_2 = arith.constant 0 : i32
    return %arg0, %c0_i32, %c0_i32_0, %c0_i32_1 : i32, i32, i32, i32
  }
  func.func @transform_3(%arg0: i32) -> (i32, i32, i32, i32) {
    %c0_i32 = arith.constant 0 : i32
    %c0_i32_0 = arith.constant 0 : i32
    %c0_i32_1 = arith.constant 0 : i32
    %c0_i32_2 = arith.constant 0 : i32
    return %arg0, %c0_i32, %c0_i32_0, %c0_i32_1 : i32, i32, i32, i32
  }
}

</mosaic_0001>

<llo_original>
// kernel: attention_spatiotemporal_block.2
$region0: #{attention_spatiotemporal_block.2}
  #allocation0 [shape = 'u32[]', space=smem, size = 0x4, offset = 0x4, fixed_abs, tag = 'smem constant byte address 0x4 - core index']
  #allocation1 [shape = 'u32[144,128]{1,0:T(1,128)}', space=vmem, size = 0x12000, scoped, tag = 'internal scratch']
  %s0 = inlined_call_operand.vmem [shape: bf16[2,108,256], index: 0, kind: input, shape index: {}]
  %s1 = inlined_call_operand.vmem [shape: bf16[32,108], index: 1, kind: input, shape index: {}]
  %s2 = inlined_call_operand.vmem [shape: f32[32,1], index: 2, kind: input, shape index: {}]
  %s3 = inlined_call_operand.vmem [shape: f32[2,32,256], index: 3, kind: output, shape index: {}]
  %s4 = sld [smem:[#allocation0]]
  $region45: #{attention_spatiotemporal_block.2} parent=0
    _
  %s6 = ssub.s32 1, %s4
  %s7 = scalar_select 0, %s6, %s4
  loop: start=0, step=1, limit=4
  $region2: #{attention_spatiotemporal_block.2} parent=0 // loop_pre_header
    _
  $region3: #{attention_spatiotemporal_block.2} parent=0 // loop_header
    %s9 = sphi 0, %s13
    %p10 = scmp.ge.s32.totalorder %s9, 4
    %s16 = sphi 0, %s28
    %s17 = sphi 0, %s24
    %s18 = sphi 0, %s16
    %s19 = sphi 0, %s17
    %s20 = sphi 0, %s18
    %s21 = sphi 0, %s19
    %s33 = sphi 0, %s35
    %s36 = sphi 0, %s33
    %s37 = sphi 0, %s36
    %s53 = sphi 0, %s37
    %s57 = sphi 0, %s57
    %s59 = sphi 0, %s57
    %s60 = sphi 0, %s59
    %s74 = sphi 0, %s60
    %s78 = sphi 0, %s78
    %s80 = sphi 0, %s78
    %s81 = sphi 0, %s80
    %s95 = sphi 0, %s81
    %s103 = sphi 0, %s105
    %s106 = sphi 0, %s103
    %s107 = sphi 0, %s106
    %s123 = sphi 0, %s107
  $region4: #{attention_spatiotemporal_block.2} parent=0 // loop_header_branch
    %12 = sbr.rel (%p10) target = $region8
  $region5: #{attention_spatiotemporal_block.2} parent=0 // loop_body
    %s14 = ssub.s32 %s9, 1
    %s15 = ssub.s32 %s9, 2
    %s22 = sadd.s32 1, %s17
    %p23 = scmp.ge.s32.totalorder %s22, 1
    %s24 = scalar_select %p23, 0, %s22
    %s25 = sadd.s32 1, %s16
    %s26 = scalar_select %p23, %s25, %s16
    %p27 = scmp.ge.s32.totalorder %s26, 2
    %s28 = scalar_select %p27, 0, %s26
    %s29 = ssub.s32 %s16, %s28
    %s30 = ssub.s32 %s17, %s24
    %s31 = sor.u32 %s29, %s30
    %p32 = scmp.eq.s32.totalorder %s31, 0
    %s34 = sadd.s32 %s33, 1
    %s35 = scalar_select %p32, %s33, %s34
    %p38 = pneg %p32
    %p39 = scmp.eq.s32.totalorder %s9, 1
    %p40 = por %p38, %p39
    %p41 = scmp.ne.s32.totalorder %s33, %s36
    %p42 = scmp.eq.s32.totalorder %s9, 0
    %p43 = por %p41, %p42
    %p44 = scmp.ne.s32.totalorder %s33, %s36
    %p45 = scmp.eq.s32.totalorder %s14, 1
    %p46 = por %p44, %p45
    %p47 = scmp.ne.s32.totalorder %s36, %s37
    %p48 = scmp.eq.s32.totalorder %s14, 0
    %p49 = por %p47, %p48
    %p50 = scmp.ne.s32.totalorder %s36, %s37
    %p51 = scmp.eq.s32.totalorder %s15, 1
    %p52 = por %p50, %p51
    %p54 = scmp.ne.s32.totalorder %s37, %s53
    %p55 = scmp.eq.s32.totalorder %s15, 0
    %p56 = por %p54, %p55
    %s58 = sadd.s32 %s57, 1
    %p61 = scmp.eq.s32.totalorder %s9, 1
    %p62 = scmp.ne.s32.totalorder %s57, %s59
    %p63 = scmp.eq.s32.totalorder %s9, 0
    %p64 = por %p62, %p63
    %p65 = scmp.ne.s32.totalorder %s57, %s59
    %p66 = scmp.eq.s32.totalorder %s14, 1
    %p67 = por %p65, %p66
    %p68 = scmp.ne.s32.totalorder %s59, %s60
    %p69 = scmp.eq.s32.totalorder %s14, 0
    %p70 = por %p68, %p69
    %p71 = scmp.ne.s32.totalorder %s59, %s60
    %p72 = scmp.eq.s32.totalorder %s15, 1
    %p73 = por %p71, %p72
    %p75 = scmp.ne.s32.totalorder %s60, %s74
    %p76 = scmp.eq.s32.totalorder %s15, 0
    %p77 = por %p75, %p76
    %s79 = sadd.s32 %s78, 1
    %p82 = scmp.eq.s32.totalorder %s9, 1
    %p83 = scmp.ne.s32.totalorder %s78, %s80
    %p84 = scmp.eq.s32.totalorder %s9, 0
    %p85 = por %p83, %p84
    %p86 = scmp.ne.s32.totalorder %s78, %s80
    %p87 = scmp.eq.s32.totalorder %s14, 1
    %p88 = por %p86, %p87
    %p89 = scmp.ne.s32.totalorder %s80, %s81
    %p90 = scmp.eq.s32.totalorder %s14, 0
    %p91 = por %p89, %p90
    %p92 = scmp.ne.s32.totalorder %s80, %s81
    %p93 = scmp.eq.s32.totalorder %s15, 1
    %p94 = por %p92, %p93
    %p96 = scmp.ne.s32.totalorder %s81, %s95
    %p97 = scmp.eq.s32.totalorder %s15, 0
    %p98 = por %p96, %p97
    %s99 = ssub.s32 %s16, %s28
    %s100 = ssub.s32 %s17, %s24
    %s101 = sor.u32 %s99, %s100
    %p102 = scmp.eq.s32.totalorder %s101, 0
    %s104 = sadd.s32 %s103, 1
    %s105 = scalar_select %p102, %s103, %s104
    %p108 = pneg %p102
    %p109 = scmp.eq.s32.totalorder %s9, 1
    %p110 = por %p108, %p109
    %p111 = scmp.ne.s32.totalorder %s103, %s106
    %p112 = scmp.eq.s32.totalorder %s9, 0
    %p113 = por %p111, %p112
    %p114 = scmp.ne.s32.totalorder %s103, %s106
    %p115 = scmp.eq.s32.totalorder %s14, 1
    %p116 = por %p114, %p115
    %p117 = scmp.ne.s32.totalorder %s106, %s107
    %p118 = scmp.eq.s32.totalorder %s14, 0
    %p119 = por %p117, %p118
    %p120 = scmp.ne.s32.totalorder %s106, %s107
    %p121 = scmp.eq.s32.totalorder %s15, 1
    %p122 = por %p120, %p121
    %p124 = scmp.ne.s32.totalorder %s107, %s123
    %p125 = scmp.eq.s32.totalorder %s15, 0
    %p126 = por %p124, %p125
    %p127 = scmp.le.s32.totalorder 1, %s9
    %p128 = scmp.lt.s32.totalorder %s9, 3
    %p129 = pnand %p127, %p128
    %p130 = pneg %p129
    // Predicated region
    $region9: #{attention_spatiotemporal_block.2} parent=5 // pred_check
      _
    $region10: #{attention_spatiotemporal_block.2} parent=5 // pred_check_branch
      %132 = sbr.rel (%p129) target = $region12
    $region11: #{attention_spatiotemporal_block.2} parent=5 // pred_region
      %s133 = ssub.s32 %s9, 1
      // Predicated region
      $region13: #{attention_spatiotemporal_block.2} parent=11 // pred_check
        %p134 = pneg %p70
      $region14: #{attention_spatiotemporal_block.2} parent=11 // pred_check_branch
        %136 = sbr.rel (%p134) target = $region16
      $region15: #{attention_spatiotemporal_block.2} parent=11 // pred_region
        _
      $region16: #{attention_spatiotemporal_block.2} parent=11 // pred_fallthru
        _
      // Predicated region
      $region17: #{attention_spatiotemporal_block.2} parent=11 // pred_check
        %p137 = pneg %p91
      $region18: #{attention_spatiotemporal_block.2} parent=11 // pred_check_branch
        %139 = sbr.rel (%p137) target = $region20
      $region19: #{attention_spatiotemporal_block.2} parent=11 // pred_region
        _
      $region20: #{attention_spatiotemporal_block.2} parent=11 // pred_fallthru
        _
    $region12: #{attention_spatiotemporal_block.2} parent=5 // pred_fallthru
      _
    %p140 = scmp.lt.s32.totalorder %s9, 2
    // Predicated region
    $region21: #{attention_spatiotemporal_block.2} parent=5 // pred_check
      %p141 = pneg %p140
    $region22: #{attention_spatiotemporal_block.2} parent=5 // pred_check_branch
      %143 = sbr.rel (%p141) target = $region24
    $region23: #{attention_spatiotemporal_block.2} parent=5 // pred_region
      // Predicated region
      $region25: #{attention_spatiotemporal_block.2} parent=23 // pred_check
        %p144 = pneg %p43
      $region26: #{attention_spatiotemporal_block.2} parent=23 // pred_check_branch
        %146 = sbr.rel (%p144) target = $region28
      $region27: #{attention_spatiotemporal_block.2} parent=23 // pred_region
        %s147 = smul.u32 2, %s17
        %p148 = scmp.lt.s32.totalorder %s16, 1
        %s149 = scalar_select %p148, %s16, 1
        %p150 = scmp.lt.s32.totalorder %s147, 1
        %s151 = scalar_select %p150, %s147, 1
        %s152 = smul.addr %s149, 28
        %s153 = sadd.s32 %s151, %s152
        %s154 = smul.addr %s153, 4
        %s155 = scalar_lea.vmem %s0, %s154
        %s156 = smul.u32 2, %s17
      $region28: #{attention_spatiotemporal_block.2} parent=23 // pred_fallthru
        _
    $region24: #{attention_spatiotemporal_block.2} parent=5 // pred_fallthru
      _
    %p157 = scmp.le.s32.totalorder 1, %s9
    %p158 = scmp.lt.s32.totalorder %s9, 3
    %p159 = pnand %p157, %p158
    %p160 = pneg %p159
    // Predicated region
    $region29: #{attention_spatiotemporal_block.2} parent=5 // pred_check
      _
    $region30: #{attention_spatiotemporal_block.2} parent=5 // pred_check_branch
      %162 = sbr.rel (%p159) target = $region32
    $region31: #{attention_spatiotemporal_block.2} parent=5 // pred_region
      %s163 = ssub.s32 %s9, 1
      %s164 = smul.u32 2, %s19
      %p165 = scmp.lt.s32.totalorder %s18, 1
      %s166 = scalar_select %p165, %s18, 1
      %p167 = scmp.lt.s32.totalorder %s164, 1
      %s168 = scalar_select %p167, %s164, 1
      %s169 = smul.addr %s166, 28
      %s170 = sadd.s32 %s168, %s169
      %s171 = smul.addr %s170, 4
      %s172 = scalar_lea.vmem %s0, %s171
      %p173 = pneg %p49
      %p174 = pneg %p46
      %p175 = pneg %p70
      %p176 = pneg %p67
      %p177 = pneg %p91
      %p178 = pneg %p88
      %p179 = pneg %p119
      %p180 = pneg %p116
      %s181 = smul.u32 2, %s19
      %p182 = scmp.lt.s32.totalorder %s18, 1
      %s183 = scalar_select %p182, %s18, 1
      %p184 = scmp.lt.s32.totalorder %s181, 1
      %s185 = scalar_select %p184, %s181, 1
      %s186 = smul.addr %s183, 8
      %s187 = sadd.s32 %s185, %s186
      %s188 = smul.addr %s187, 8
      %s189 = scalar_lea.vmem %s3, %s188
      %s190 = smul.u32 2, %s19
      %p191 = scmp.lt.s32.totalorder %s18, 1
      %s192 = scalar_select %p191, %s18, 1
      %p193 = scmp.lt.s32.totalorder %s190, 1
      %s194 = scalar_select %p193, %s190, 1
      %s195 = smul.addr %s192, 28
      %s196 = sadd.s32 %s194, %s195
      %s197 = smul.addr %s196, 4
      %s198 = scalar_lea.vmem %s0, %s197
      %s199 = smul.u32 2, %s19
      %s200 = smul.u32 2, %s19
      %p201 = scmp.lt.s32.totalorder %s18, 1
      %s202 = scalar_select %p201, %s18, 1
      %p203 = scmp.lt.s32.totalorder %s200, 1
      %s204 = scalar_select %p203, %s200, 1
      %s205 = smul.addr %s202, 8
      %s206 = sadd.s32 %s204, %s205
      %s207 = smul.addr %s206, 8
      %s208 = scalar_lea.vmem %s3, %s207
      %s209 = smul.u32 2, %s19
      %v211 = vld [vmem:[%s1] sm:$0xf]
      %v212 = vld [vmem:[%s1 + $0x4] sm:$0xf]
      %v213 = vld [vmem:[%s1 + $0x8] sm:$0xf]
      %v214 = vld [vmem:[%s1 + $0xc] sm:$0xf]
      %v215 = vld [vmem:[%s198] sm:$0xff]
      %v216 = vld [vmem:[%s198 + $0x8] sm:$0xff]
      %v217 = vld [vmem:[%s198 + $0x10] sm:$0xff]
      %v218 = vld [vmem:[%s198 + $0x18] sm:$0xff]
      %v219 = vld [vmem:[%s198 + $0x20] sm:$0xff]
      %v220 = vld [vmem:[%s198 + $0x28] sm:$0xff]
      %v221 = vld [vmem:[%s198 + $0x30] sm:$0xff]
      %v222 = vld [vmem:[%s198 + $0x38] sm:$0xff]
      %v223 = vld [vmem:[%s198 + $0x40] sm:$0xff]
      %v224 = vld [vmem:[%s198 + $0x48] sm:$0xff]
      %v225 = vld [vmem:[%s198 + $0x50] sm:$0xff]
      %v226 = vld [vmem:[%s198 + $0x58] sm:$0xff]
      %v227 = vld [vmem:[%s198 + $0x60] sm:$0xff]
      %v228 = vld [vmem:[%s198 + $0x68] sm:$0x33]
      %v229 = vld [vmem:[%s2] sm:$0xff]
      %v230 = vld [vmem:[%s2 + $0x8] sm:$0xff]
      %v231 = vld [vmem:[%s2 + $0x10] sm:$0xff]
      %v232 = vld [vmem:[%s2 + $0x18] sm:$0xff]
      %234 = vset.pattern.permute.xlu0 0
      %235 = vperm.xlu0 %234, %v229
      %v236 = vpop.permute.xlu0 %235
      %239 = vset.pattern.permute.xlu0 0
      %240 = vperm.xlu0 %239, %v230
      %v241 = vpop.permute.xlu0 %240
      %244 = vset.pattern.permute.xlu0 0
      %245 = vperm.xlu0 %244, %v231
      %v246 = vpop.permute.xlu0 %245
      %249 = vset.pattern.permute.xlu0 0
      %250 = vperm.xlu0 %249, %v232
      %v251 = vpop.permute.xlu0 %250
      %v257 = vunpack.c.l.b16 %v211
      %v258 = vunpack.c.l.b16 %v212
      %v259 = vunpack.c.l.b16 %v213
      %v260 = vunpack.c.l.b16 %v214
      %v261 = vpack.c.b16 %v258, %v257
      %v262 = vpack.c.b16 %v260, %v259
      %v277 = vunpack.c.l.b16 %v215
      %v278 = vunpack.c.h.b16 %v215
      %v279 = vunpack.c.l.b16 %v216
      %v280 = vunpack.c.h.b16 %v216
      %v281 = vunpack.c.l.b16 %v217
      %v282 = vunpack.c.h.b16 %v217
      %v283 = vunpack.c.l.b16 %v218
      %v284 = vunpack.c.h.b16 %v218
      %v285 = vunpack.c.l.b16 %v219
      %v286 = vunpack.c.h.b16 %v219
      %v287 = vunpack.c.l.b16 %v220
      %v288 = vunpack.c.h.b16 %v220
      %v289 = vunpack.c.l.b16 %v221
      %v290 = vunpack.c.h.b16 %v221
      %v291 = vunpack.c.l.b16 %v222
      %v292 = vunpack.c.h.b16 %v222
      %v293 = vunpack.c.l.b16 %v223
      %v294 = vunpack.c.h.b16 %v223
      %v295 = vunpack.c.l.b16 %v224
      %v296 = vunpack.c.h.b16 %v224
      %v297 = vunpack.c.l.b16 %v225
      %v298 = vunpack.c.h.b16 %v225
      %v299 = vunpack.c.l.b16 %v226
      %v300 = vunpack.c.h.b16 %v226
      %v301 = vunpack.c.l.b16 %v227
      %v302 = vunpack.c.h.b16 %v227
      %v303 = vunpack.c.l.b16 %v228
      %v304 = vunpack.c.h.b16 %v228
      %v305 = vpack.c.b16 %v279, %v277
      %v306 = vpack.c.b16 %v280, %v278
      %v307 = vpack.c.b16 %v283, %v281
      %v308 = vpack.c.b16 %v284, %v282
      %v309 = vpack.c.b16 %v287, %v285
      %v310 = vpack.c.b16 %v288, %v286
      %v311 = vpack.c.b16 %v291, %v289
      %v312 = vpack.c.b16 %v292, %v290
      %v313 = vpack.c.b16 %v295, %v293
      %v314 = vpack.c.b16 %v296, %v294
      %v315 = vpack.c.b16 %v299, %v297
      %v316 = vpack.c.b16 %v300, %v298
      %v317 = vpack.c.b16 %v303, %v301
      %v318 = vpack.c.b16 %v304, %v302
      %vm331 = vcmask 883712
      %v333 = vsel %vm331, %v261, 0
      %v336 = vsel %vm331, %v262, 0
      %vm338 = vcmask 1045504
      %v340 = vsel %vm338, %v317, 0
      %v343 = vsel %vm338, %v318, 0
      %345 = vmatprep.subr.bf16.mxu0 0
      %346 = vmatpush1.bf16.msra.mxu0 0
      %347 = vmatprep.subr.bf16.mxu0 %v343
      %348 = vmatpush1.bf16.msra.mxu0 %v340
      %349 = vmatprep.subr.bf16.mxu0 %v316
      %350 = vmatpush1.bf16.msra.mxu0 %v315
      %351 = vmatprep.subr.bf16.mxu0 %v314
      %352 = vmatpush1.bf16.msra.mxu0 %v313
      %353 = vmatprep.subr.bf16.mxu0 %v312
      %354 = vmatpush1.bf16.msra.mxu0 %v311
      %355 = vmatprep.subr.bf16.mxu0 %v310
      %356 = vmatpush1.bf16.msra.mxu0 %v309
      %357 = vmatprep.subr.bf16.mxu0 %v308
      %358 = vmatpush1.bf16.msra.mxu0 %v307
      %359 = vmatprep.subr.bf16.mxu0 %v306
      %360 = vmatpush1.bf16.msra.mxu0 %v305
      %361 = vmatprep.subr.bf16.mxu0 0
      %362 = vmatpush2.bf16.msra.mxu0 0
      %363 = vmatprep.subr.bf16.mxu0 0
      %364 = vmatpush2.bf16.msra.mxu0 0
      %365 = vmatprep.subr.bf16.mxu0 0
      %366 = vmatpush2.bf16.msra.mxu0 0
      %367 = vmatprep.subr.bf16.mxu0 0
      %368 = vmatpush2.bf16.msra.mxu0 0
      %369 = vmatprep.subr.bf16.mxu0 0
      %370 = vmatpush2.bf16.msra.mxu0 0
      %371 = vmatprep.subr.bf16.mxu0 0
      %372 = vmatpush2.bf16.msra.mxu0 0
      %373 = vmatprep.subr.bf16.mxu0 0
      %374 = vmatpush2.bf16.msra.mxu0 0
      %375 = vmatprep.subr.bf16.mxu0 0
      %376 = vmatpush2.bf16.msra.mxu0 0
      %377 = vmatprep.mubr.bf16.mxu0 0
      %378 = vmatmul.mubr.bf16.gmra.mxu0 %v333
      %v379 = vpop.f32.mrf.mxu0
      %v380 = vadd.f32 %v236, %v379
      %v381 = vpop.f32.mrf.mxu0
      %v382 = vadd.f32 %v236, %v381
      %v383 = vpop.f32.mrf.mxu0
      %v384 = vadd.f32 %v241, %v383
      %v385 = vpop.f32.mrf.mxu0
      %v386 = vadd.f32 %v241, %v385
      %387 = vmatprep.mubr.bf16.mxu0 0
      %388 = vmatmul.mubr.bf16.gmra.mxu0 %v336
      %v389 = vpop.f32.mrf.mxu0
      %v390 = vadd.f32 %v246, %v389
      %v391 = vpop.f32.mrf.mxu0
      %v392 = vadd.f32 %v246, %v391
      %v393 = vpop.f32.mrf.mxu0
      %v394 = vadd.f32 %v251, %v393
      %v395 = vpop.f32.mrf.mxu0
      %v396 = vadd.f32 %v251, %v395
      %397 = vdwg.mxu0
      %v398 = vmax.f32 %v380, 0.0
      %v399 = vmax.f32 %v382, 0.0
      %v400 = vmax.f32 %v384, 0.0
      %v401 = vmax.f32 %v386, 0.0
      %v402 = vmax.f32 %v390, 0.0
      %v403 = vmax.f32 %v392, 0.0
      %v404 = vmax.f32 %v394, 0.0
      %v405 = vmax.f32 %v396, 0.0
      %406 = vst [vmem:[%s208] sm:$0xff] %v398
      %407 = vst [vmem:[%s208 + $0x8] sm:$0xff] %v399
      %408 = vst [vmem:[%s208 + $0x10] sm:$0xff] %v400
      %409 = vst [vmem:[%s208 + $0x18] sm:$0xff] %v401
      %410 = vst [vmem:[%s208 + $0x20] sm:$0xff] %v402
      %411 = vst [vmem:[%s208 + $0x28] sm:$0xff] %v403
      %412 = vst [vmem:[%s208 + $0x30] sm:$0xff] %v404
      %413 = vst [vmem:[%s208 + $0x38] sm:$0xff] %v405
      %s414 = smul.u32 2, %s19
      %p415 = scmp.lt.s32.totalorder %s18, 1
      %s416 = scalar_select %p415, %s18, 1
      %p417 = scmp.lt.s32.totalorder %s414, 1
      %s418 = scalar_select %p417, %s414, 1
      %s419 = smul.addr %s416, 8
      %s420 = sadd.s32 %s418, %s419
      %s421 = smul.addr %s420, 8
      %s422 = scalar_lea.vmem %s3, %s421
      // Predicated region
      $region33: #{attention_spatiotemporal_block.2} parent=31 // pred_check
        %p423 = pneg %p116
      $region34: #{attention_spatiotemporal_block.2} parent=31 // pred_check_branch
        %425 = sbr.rel (%p423) target = $region36
      $region35: #{attention_spatiotemporal_block.2} parent=31 // pred_region
        %s426 = smul.u32 2, %s19
      $region36: #{attention_spatiotemporal_block.2} parent=31 // pred_fallthru
        _
    $region32: #{attention_spatiotemporal_block.2} parent=5 // pred_fallthru
      _
    %p427 = scmp.le.s32.totalorder 2, %s9
    // Predicated region
    $region37: #{attention_spatiotemporal_block.2} parent=5 // pred_check
      %p428 = pneg %p427
    $region38: #{attention_spatiotemporal_block.2} parent=5 // pred_check_branch
      %430 = sbr.rel (%p428) target = $region40
    $region39: #{attention_spatiotemporal_block.2} parent=5 // pred_region
      %s431 = ssub.s32 %s9, 2
      // Predicated region
      $region41: #{attention_spatiotemporal_block.2} parent=39 // pred_check
        %p432 = pneg %p122
      $region42: #{attention_spatiotemporal_block.2} parent=39 // pred_check_branch
        %434 = sbr.rel (%p432) target = $region44
      $region43: #{attention_spatiotemporal_block.2} parent=39 // pred_region
        %s435 = smul.u32 2, %s21
        %p436 = scmp.lt.s32.totalorder %s20, 1
        %s437 = scalar_select %p436, %s20, 1
        %p438 = scmp.lt.s32.totalorder %s435, 1
        %s439 = scalar_select %p438, %s435, 1
        %s440 = smul.addr %s437, 8
        %s441 = sadd.s32 %s439, %s440
        %s442 = smul.addr %s441, 8
        %s443 = scalar_lea.vmem %s3, %s442
      $region44: #{attention_spatiotemporal_block.2} parent=39 // pred_fallthru
        _
    $region40: #{attention_spatiotemporal_block.2} parent=5 // pred_fallthru
      _
  $region6: #{attention_spatiotemporal_block.2} parent=0 // loop_footer
    %s13 = sadd.s32 1, %s9
  $region7: #{attention_spatiotemporal_block.2} parent=0 // loop_footer_branch
    %8 = sbr.rel target = $region3
  $region8: #{attention_spatiotemporal_block.2} parent=0 // loop_exit
    _

// kernel: attention_spatiotemporal_block.3
$region0: #{attention_spatiotemporal_block.3}
  #allocation0 [shape = 'u32[]', space=smem, size = 0x4, offset = 0x4, fixed_abs, tag = 'smem constant byte address 0x4 - core index']
  #allocation1 [shape = 'u32[144,128]{1,0:T(1,128)}', space=vmem, size = 0x12000, scoped, tag = 'internal scratch']
  %s0 = inlined_call_operand.vmem [shape: f32[2,32,4,64], index: 0, kind: input, shape index: {}]
  %s1 = inlined_call_operand.vmem [shape: f32[2,16,4,1], index: 1, kind: input, shape index: {}]
  %s2 = inlined_call_operand.vmem [shape: f32[2,16,1,64], index: 2, kind: input, shape index: {}]
  %s3 = inlined_call_operand.vmem [shape: f32[2,16,4,64], index: 3, kind: output, shape index: {}]
  %s4 = sld [smem:[#allocation0]]
  $region45: #{attention_spatiotemporal_block.3} parent=0
    _
  %s6 = ssub.s32 1, %s4
  %s7 = scalar_select 0, %s6, %s4
  loop: start=0, step=1, limit=4
  $region2: #{attention_spatiotemporal_block.3} parent=0 // loop_pre_header
    _
  $region3: #{attention_spatiotemporal_block.3} parent=0 // loop_header
    %s9 = sphi 0, %s13
    %p10 = scmp.ge.s32.totalorder %s9, 4
    %s19 = sphi 0, %s21
    %s22 = sphi 0, %s19
    %s23 = sphi 0, %s22
    %s39 = sphi 0, %s23
    %s45 = sphi 0, %s47
    %s48 = sphi 0, %s45
    %s49 = sphi 0, %s48
    %s65 = sphi 0, %s49
    %s71 = sphi 0, %s73
    %s74 = sphi 0, %s71
    %s75 = sphi 0, %s74
    %s91 = sphi 0, %s75
    %s97 = sphi 0, %s99
    %s100 = sphi 0, %s97
    %s101 = sphi 0, %s100
    %s117 = sphi 0, %s101
  $region4: #{attention_spatiotemporal_block.3} parent=0 // loop_header_branch
    %12 = sbr.rel (%p10) target = $region8
  $region5: #{attention_spatiotemporal_block.3} parent=0 // loop_body
    %s14 = ssub.s32 %s9, 1
    %s15 = ssub.s32 %s9, 2
    %s16 = sadd.s32 %s9, 1
    %s17 = ssub.s32 %s9, %s16
    %p18 = scmp.eq.s32.totalorder %s17, 0
    %s20 = sadd.s32 %s19, 1
    %s21 = scalar_select %p18, %s19, %s20
    %p24 = pneg %p18
    %p25 = scmp.eq.s32.totalorder %s9, 1
    %p26 = por %p24, %p25
    %p27 = scmp.ne.s32.totalorder %s19, %s22
    %p28 = scmp.eq.s32.totalorder %s9, 0
    %p29 = por %p27, %p28
    %p30 = scmp.ne.s32.totalorder %s19, %s22
    %p31 = scmp.eq.s32.totalorder %s14, 1
    %p32 = por %p30, %p31
    %p33 = scmp.ne.s32.totalorder %s22, %s23
    %p34 = scmp.eq.s32.totalorder %s14, 0
    %p35 = por %p33, %p34
    %p36 = scmp.ne.s32.totalorder %s22, %s23
    %p37 = scmp.eq.s32.totalorder %s15, 1
    %p38 = por %p36, %p37
    %p40 = scmp.ne.s32.totalorder %s23, %s39
    %p41 = scmp.eq.s32.totalorder %s15, 0
    %p42 = por %p40, %p41
    %s43 = ssub.s32 %s9, %s16
    %p44 = scmp.eq.s32.totalorder %s43, 0
    %s46 = sadd.s32 %s45, 1
    %s47 = scalar_select %p44, %s45, %s46
    %p50 = pneg %p44
    %p51 = scmp.eq.s32.totalorder %s9, 1
    %p52 = por %p50, %p51
    %p53 = scmp.ne.s32.totalorder %s45, %s48
    %p54 = scmp.eq.s32.totalorder %s9, 0
    %p55 = por %p53, %p54
    %p56 = scmp.ne.s32.totalorder %s45, %s48
    %p57 = scmp.eq.s32.totalorder %s14, 1
    %p58 = por %p56, %p57
    %p59 = scmp.ne.s32.totalorder %s48, %s49
    %p60 = scmp.eq.s32.totalorder %s14, 0
    %p61 = por %p59, %p60
    %p62 = scmp.ne.s32.totalorder %s48, %s49
    %p63 = scmp.eq.s32.totalorder %s15, 1
    %p64 = por %p62, %p63
    %p66 = scmp.ne.s32.totalorder %s49, %s65
    %p67 = scmp.eq.s32.totalorder %s15, 0
    %p68 = por %p66, %p67
    %s69 = ssub.s32 %s9, %s16
    %p70 = scmp.eq.s32.totalorder %s69, 0
    %s72 = sadd.s32 %s71, 1
    %s73 = scalar_select %p70, %s71, %s72
    %p76 = pneg %p70
    %p77 = scmp.eq.s32.totalorder %s9, 1
    %p78 = por %p76, %p77
    %p79 = scmp.ne.s32.totalorder %s71, %s74
    %p80 = scmp.eq.s32.totalorder %s9, 0
    %p81 = por %p79, %p80
    %p82 = scmp.ne.s32.totalorder %s71, %s74
    %p83 = scmp.eq.s32.totalorder %s14, 1
    %p84 = por %p82, %p83
    %p85 = scmp.ne.s32.totalorder %s74, %s75
    %p86 = scmp.eq.s32.totalorder %s14, 0
    %p87 = por %p85, %p86
    %p88 = scmp.ne.s32.totalorder %s74, %s75
    %p89 = scmp.eq.s32.totalorder %s15, 1
    %p90 = por %p88, %p89
    %p92 = scmp.ne.s32.totalorder %s75, %s91
    %p93 = scmp.eq.s32.totalorder %s15, 0
    %p94 = por %p92, %p93
    %s95 = ssub.s32 %s9, %s16
    %p96 = scmp.eq.s32.totalorder %s95, 0
    %s98 = sadd.s32 %s97, 1
    %s99 = scalar_select %p96, %s97, %s98
    %p102 = pneg %p96
    %p103 = scmp.eq.s32.totalorder %s9, 1
    %p104 = por %p102, %p103
    %p105 = scmp.ne.s32.totalorder %s97, %s100
    %p106 = scmp.eq.s32.totalorder %s9, 0
    %p107 = por %p105, %p106
    %p108 = scmp.ne.s32.totalorder %s97, %s100
    %p109 = scmp.eq.s32.totalorder %s14, 1
    %p110 = por %p108, %p109
    %p111 = scmp.ne.s32.totalorder %s100, %s101
    %p112 = scmp.eq.s32.totalorder %s14, 0
    %p113 = por %p111, %p112
    %p114 = scmp.ne.s32.totalorder %s100, %s101
    %p115 = scmp.eq.s32.totalorder %s15, 1
    %p116 = por %p114, %p115
    %p118 = scmp.ne.s32.totalorder %s101, %s117
    %p119 = scmp.eq.s32.totalorder %s15, 0
    %p120 = por %p118, %p119
    %p121 = scmp.le.s32.totalorder 1, %s9
    %p122 = scmp.lt.s32.totalorder %s9, 3
    %p123 = pnand %p121, %p122
    %p124 = pneg %p123
    // Predicated region
    $region9: #{attention_spatiotemporal_block.3} parent=5 // pred_check
      _
    $region10: #{attention_spatiotemporal_block.3} parent=5 // pred_check_branch
      %126 = sbr.rel (%p123) target = $region12
    $region11: #{attention_spatiotemporal_block.3} parent=5 // pred_region
      %s127 = ssub.s32 %s9, 1
    $region12: #{attention_spatiotemporal_block.3} parent=5 // pred_fallthru
      _
    %p128 = scmp.lt.s32.totalorder %s9, 2
    // Predicated region
    $region13: #{attention_spatiotemporal_block.3} parent=5 // pred_check
      %p129 = pneg %p128
    $region14: #{attention_spatiotemporal_block.3} parent=5 // pred_check_branch
      %131 = sbr.rel (%p129) target = $region16
    $region15: #{attention_spatiotemporal_block.3} parent=5 // pred_region
      // Predicated region
      $region17: #{attention_spatiotemporal_block.3} parent=15 // pred_check
        %p132 = pneg %p29
      $region18: #{attention_spatiotemporal_block.3} parent=15 // pred_check_branch
        %134 = sbr.rel (%p132) target = $region20
      $region19: #{attention_spatiotemporal_block.3} parent=15 // pred_region
        %p135 = scmp.lt.s32.totalorder %s9, 1
        %s136 = scalar_select %p135, %s9, 1
        %s137 = smul.addr %s136, 32
        %s138 = smul.addr %s137, 4
        %s139 = scalar_lea.vmem %s0, %s138
      $region20: #{attention_spatiotemporal_block.3} parent=15 // pred_fallthru
        _
      // Predicated region
      $region21: #{attention_spatiotemporal_block.3} parent=15 // pred_check
        %p140 = pneg %p55
      $region22: #{attention_spatiotemporal_block.3} parent=15 // pred_check_branch
        %142 = sbr.rel (%p140) target = $region24
      $region23: #{attention_spatiotemporal_block.3} parent=15 // pred_region
        %p143 = scmp.lt.s32.totalorder %s9, 1
        %s144 = scalar_select %p143, %s9, 1
        %s145 = smul.addr %s144, 16
        %s146 = smul.addr %s145, 4
        %s147 = scalar_lea.vmem %s1, %s146
      $region24: #{attention_spatiotemporal_block.3} parent=15 // pred_fallthru
        _
      // Predicated region
      $region25: #{attention_spatiotemporal_block.3} parent=15 // pred_check
        %p148 = pneg %p81
      $region26: #{attention_spatiotemporal_block.3} parent=15 // pred_check_branch
        %150 = sbr.rel (%p148) target = $region28
      $region27: #{attention_spatiotemporal_block.3} parent=15 // pred_region
        %p151 = scmp.lt.s32.totalorder %s9, 1
        %s152 = scalar_select %p151, %s9, 1
        %s153 = smul.addr %s152, 16
        %s154 = scalar_lea.vmem %s2, %s153
      $region28: #{attention_spatiotemporal_block.3} parent=15 // pred_fallthru
        _
    $region16: #{attention_spatiotemporal_block.3} parent=5 // pred_fallthru
      _
    %p155 = scmp.le.s32.totalorder 1, %s9
    %p156 = scmp.lt.s32.totalorder %s9, 3
    %p157 = pnand %p155, %p156
    %p158 = pneg %p157
    // Predicated region
    $region29: #{attention_spatiotemporal_block.3} parent=5 // pred_check
      _
    $region30: #{attention_spatiotemporal_block.3} parent=5 // pred_check_branch
      %160 = sbr.rel (%p157) target = $region32
    $region31: #{attention_spatiotemporal_block.3} parent=5 // pred_region
      %s161 = ssub.s32 %s9, 1
      %p162 = scmp.lt.s32.totalorder %s14, 1
      %s163 = scalar_select %p162, %s14, 1
      %s164 = smul.addr %s163, 32
      %s165 = smul.addr %s164, 4
      %s166 = scalar_lea.vmem %s0, %s165
      %p167 = pneg %p35
      %p168 = pneg %p32
      %p169 = scmp.lt.s32.totalorder %s14, 1
      %s170 = scalar_select %p169, %s14, 1
      %s171 = smul.addr %s170, 16
      %s172 = smul.addr %s171, 4
      %s173 = scalar_lea.vmem %s1, %s172
      %p174 = pneg %p61
      %p175 = pneg %p58
      %p176 = scmp.lt.s32.totalorder %s14, 1
      %s177 = scalar_select %p176, %s14, 1
      %s178 = smul.addr %s177, 16
      %s179 = scalar_lea.vmem %s2, %s178
      %p180 = pneg %p87
      %p181 = pneg %p84
      %p182 = pneg %p113
      %p183 = pneg %p110
      %p184 = scmp.lt.s32.totalorder %s14, 1
      %s185 = scalar_select %p184, %s14, 1
      %s186 = smul.addr %s185, 16
      %s187 = smul.addr %s186, 4
      %s188 = scalar_lea.vmem %s3, %s187
      %p189 = scmp.lt.s32.totalorder %s14, 1
      %s190 = scalar_select %p189, %s14, 1
      %s191 = smul.addr %s190, 32
      %s192 = smul.addr %s191, 4
      %s193 = scalar_lea.vmem %s0, %s192
      %p194 = scmp.lt.s32.totalorder %s14, 1
      %s195 = scalar_select %p194, %s14, 1
      %s196 = smul.addr %s195, 16
      %s197 = smul.addr %s196, 4
      %s198 = scalar_lea.vmem %s1, %s197
      %p199 = scmp.lt.s32.totalorder %s14, 1
      %s200 = scalar_select %p199, %s14, 1
      %s201 = smul.addr %s200, 16
      %s202 = scalar_lea.vmem %s2, %s201
      %p203 = scmp.lt.s32.totalorder %s14, 1
      %s204 = scalar_select %p203, %s14, 1
      %s205 = smul.addr %s204, 16
      %s206 = smul.addr %s205, 4
      %s207 = scalar_lea.vmem %s3, %s206
      %v208 = vld [vmem:[%s193] sm:$0xf]
      %v209 = vld [vmem:[%s193 + $0x4] sm:$0xf]
      %v210 = vld [vmem:[%s193 + $0x8] sm:$0xf]
      %v211 = vld [vmem:[%s193 + $0xc] sm:$0xf]
      %v212 = vld [vmem:[%s193 + $0x10] sm:$0xf]
      %v213 = vld [vmem:[%s193 + $0x14] sm:$0xf]
      %v214 = vld [vmem:[%s193 + $0x18] sm:$0xf]
      %v215 = vld [vmem:[%s193 + $0x1c] sm:$0xf]
      %v216 = vld [vmem:[%s193 + $0x20] sm:$0xf]
      %v217 = vld [vmem:[%s193 + $0x24] sm:$0xf]
      %v218 = vld [vmem:[%s193 + $0x28] sm:$0xf]
      %v219 = vld [vmem:[%s193 + $0x2c] sm:$0xf]
      %v220 = vld [vmem:[%s193 + $0x30] sm:$0xf]
      %v221 = vld [vmem:[%s193 + $0x34] sm:$0xf]
      %v222 = vld [vmem:[%s193 + $0x38] sm:$0xf]
      %v223 = vld [vmem:[%s193 + $0x3c] sm:$0xf]
      %v224 = vld [vmem:[%s193 + $0x40] sm:$0xf]
      %v225 = vld [vmem:[%s193 + $0x44] sm:$0xf]
      %v226 = vld [vmem:[%s193 + $0x48] sm:$0xf]
      %v227 = vld [vmem:[%s193 + $0x4c] sm:$0xf]
      %v228 = vld [vmem:[%s193 + $0x50] sm:$0xf]
      %v229 = vld [vmem:[%s193 + $0x54] sm:$0xf]
      %v230 = vld [vmem:[%s193 + $0x58] sm:$0xf]
      %v231 = vld [vmem:[%s193 + $0x5c] sm:$0xf]
      %v232 = vld [vmem:[%s193 + $0x60] sm:$0xf]
      %v233 = vld [vmem:[%s193 + $0x64] sm:$0xf]
      %v234 = vld [vmem:[%s193 + $0x68] sm:$0xf]
      %v235 = vld [vmem:[%s193 + $0x6c] sm:$0xf]
      %v236 = vld [vmem:[%s193 + $0x70] sm:$0xf]
      %v237 = vld [vmem:[%s193 + $0x74] sm:$0xf]
      %v238 = vld [vmem:[%s193 + $0x78] sm:$0xf]
      %v239 = vld [vmem:[%s193 + $0x7c] sm:$0xf]
      %v240 = vld [vmem:[%s198] sm:$0xf]
      %v241 = vld [vmem:[%s198 + $0x4] sm:$0xf]
      %v242 = vld [vmem:[%s198 + $0x8] sm:$0xf]
      %v243 = vld [vmem:[%s198 + $0xc] sm:$0xf]
      %v244 = vld [vmem:[%s198 + $0x10] sm:$0xf]
      %v245 = vld [vmem:[%s198 + $0x14] sm:$0xf]
      %v246 = vld [vmem:[%s198 + $0x18] sm:$0xf]
      %v247 = vld [vmem:[%s198 + $0x1c] sm:$0xf]
      %v248 = vld [vmem:[%s198 + $0x20] sm:$0xf]
      %v249 = vld [vmem:[%s198 + $0x24] sm:$0xf]
      %v250 = vld [vmem:[%s198 + $0x28] sm:$0xf]
      %v251 = vld [vmem:[%s198 + $0x2c] sm:$0xf]
      %v252 = vld [vmem:[%s198 + $0x30] sm:$0xf]
      %v253 = vld [vmem:[%s198 + $0x34] sm:$0xf]
      %v254 = vld [vmem:[%s198 + $0x38] sm:$0xf]
      %v255 = vld [vmem:[%s198 + $0x3c] sm:$0xf]
      %v256 = vld [vmem:[%s202] sm:$0x1]
      %v257 = vld [vmem:[%s202 + $0x1] sm:$0x1]
      %v258 = vld [vmem:[%s202 + $0x2] sm:$0x1]
      %v259 = vld [vmem:[%s202 + $0x3] sm:$0x1]
      %v260 = vld [vmem:[%s202 + $0x4] sm:$0x1]
      %v261 = vld [vmem:[%s202 + $0x5] sm:$0x1]
      %v262 = vld [vmem:[%s202 + $0x6] sm:$0x1]
      %v263 = vld [vmem:[%s202 + $0x7] sm:$0x1]
      %v264 = vld [vmem:[%s202 + $0x8] sm:$0x1]
      %v265 = vld [vmem:[%s202 + $0x9] sm:$0x1]
      %v266 = vld [vmem:[%s202 + $0xa] sm:$0x1]
      %v267 = vld [vmem:[%s202 + $0xb] sm:$0x1]
      %v268 = vld [vmem:[%s202 + $0xc] sm:$0x1]
      %v269 = vld [vmem:[%s202 + $0xd] sm:$0x1]
      %v270 = vld [vmem:[%s202 + $0xe] sm:$0x1]
      %v271 = vld [vmem:[%s202 + $0xf] sm:$0x1]
      %273 = vset.pattern.permute.xlu0 0
      %274 = vperm.xlu0 %273, %v240
      %v275 = vpop.permute.xlu0 %274
      %278 = vset.pattern.permute.xlu0 0
      %279 = vperm.xlu0 %278, %v241
      %v280 = vpop.permute.xlu0 %279
      %283 = vset.pattern.permute.xlu0 0
      %284 = vperm.xlu0 %283, %v242
      %v285 = vpop.permute.xlu0 %284
      %288 = vset.pattern.permute.xlu0 0
      %289 = vperm.xlu0 %288, %v243
      %v290 = vpop.permute.xlu0 %289
      %293 = vset.pattern.permute.xlu0 0
      %294 = vperm.xlu0 %293, %v244
      %v295 = vpop.permute.xlu0 %294
      %298 = vset.pattern.permute.xlu0 0
      %299 = vperm.xlu0 %298, %v245
      %v300 = vpop.permute.xlu0 %299
      %303 = vset.pattern.permute.xlu0 0
      %304 = vperm.xlu0 %303, %v246
      %v305 = vpop.permute.xlu0 %304
      %308 = vset.pattern.permute.xlu0 0
      %309 = vperm.xlu0 %308, %v247
      %v310 = vpop.permute.xlu0 %309
      %313 = vset.pattern.permute.xlu0 0
      %314 = vperm.xlu0 %313, %v248
      %v315 = vpop.permute.xlu0 %314
      %318 = vset.pattern.permute.xlu0 0
      %319 = vperm.xlu0 %318, %v249
      %v320 = vpop.permute.xlu0 %319
      %323 = vset.pattern.permute.xlu0 0
      %324 = vperm.xlu0 %323, %v250
      %v325 = vpop.permute.xlu0 %324
      %328 = vset.pattern.permute.xlu0 0
      %329 = vperm.xlu0 %328, %v251
      %v330 = vpop.permute.xlu0 %329
      %333 = vset.pattern.permute.xlu0 0
      %334 = vperm.xlu0 %333, %v252
      %v335 = vpop.permute.xlu0 %334
      %338 = vset.pattern.permute.xlu0 0
      %339 = vperm.xlu0 %338, %v253
      %v340 = vpop.permute.xlu0 %339
      %343 = vset.pattern.permute.xlu0 0
      %344 = vperm.xlu0 %343, %v254
      %v345 = vpop.permute.xlu0 %344
      %348 = vset.pattern.permute.xlu0 0
      %349 = vperm.xlu0 %348, %v255
      %v350 = vpop.permute.xlu0 %349
      %v368 = vlaneseq
      %v369 = vshrl.u32 %v368, 7
      %v370 = vsub.s32 0, %v369
      %v371 = vrot.slane %v256, %v370
      %v372 = vlaneseq
      %v373 = vshrl.u32 %v372, 7
      %v374 = vsub.s32 0, %v373
      %v375 = vrot.slane %v257, %v374
      %v376 = vlaneseq
      %v377 = vshrl.u32 %v376, 7
      %v378 = vsub.s32 0, %v377
      %v379 = vrot.slane %v258, %v378
      %v380 = vlaneseq
      %v381 = vshrl.u32 %v380, 7
      %v382 = vsub.s32 0, %v381
      %v383 = vrot.slane %v259, %v382
      %v384 = vlaneseq
      %v385 = vshrl.u32 %v384, 7
      %v386 = vsub.s32 0, %v385
      %v387 = vrot.slane %v260, %v386
      %v388 = vlaneseq
      %v389 = vshrl.u32 %v388, 7
      %v390 = vsub.s32 0, %v389
      %v391 = vrot.slane %v261, %v390
      %v392 = vlaneseq
      %v393 = vshrl.u32 %v392, 7
      %v394 = vsub.s32 0, %v393
      %v395 = vrot.slane %v262, %v394
      %v396 = vlaneseq
      %v397 = vshrl.u32 %v396, 7
      %v398 = vsub.s32 0, %v397
      %v399 = vrot.slane %v263, %v398
      %v400 = vlaneseq
      %v401 = vshrl.u32 %v400, 7
      %v402 = vsub.s32 0, %v401
      %v403 = vrot.slane %v264, %v402
      %v404 = vlaneseq
      %v405 = vshrl.u32 %v404, 7
      %v406 = vsub.s32 0, %v405
      %v407 = vrot.slane %v265, %v406
      %v408 = vlaneseq
      %v409 = vshrl.u32 %v408, 7
      %v410 = vsub.s32 0, %v409
      %v411 = vrot.slane %v266, %v410
      %v412 = vlaneseq
      %v413 = vshrl.u32 %v412, 7
      %v414 = vsub.s32 0, %v413
      %v415 = vrot.slane %v267, %v414
      %v416 = vlaneseq
      %v417 = vshrl.u32 %v416, 7
      %v418 = vsub.s32 0, %v417
      %v419 = vrot.slane %v268, %v418
      %v420 = vlaneseq
      %v421 = vshrl.u32 %v420, 7
      %v422 = vsub.s32 0, %v421
      %v423 = vrot.slane %v269, %v422
      %v424 = vlaneseq
      %v425 = vshrl.u32 %v424, 7
      %v426 = vsub.s32 0, %v425
      %v427 = vrot.slane %v270, %v426
      %v428 = vlaneseq
      %v429 = vshrl.u32 %v428, 7
      %v430 = vsub.s32 0, %v429
      %v431 = vrot.slane %v271, %v430
      %v448 = vmul.f32 %v275, %v371
      %v449 = vmul.f32 %v280, %v375
      %v450 = vmul.f32 %v285, %v379
      %v451 = vmul.f32 %v290, %v383
      %v452 = vmul.f32 %v295, %v387
      %v453 = vmul.f32 %v300, %v391
      %v454 = vmul.f32 %v305, %v395
      %v455 = vmul.f32 %v310, %v399
      %v456 = vmul.f32 %v315, %v403
      %v457 = vmul.f32 %v320, %v407
      %v458 = vmul.f32 %v325, %v411
      %v459 = vmul.f32 %v330, %v415
      %v460 = vmul.f32 %v335, %v419
      %v461 = vmul.f32 %v340, %v423
      %v462 = vmul.f32 %v345, %v427
      %v463 = vmul.f32 %v350, %v431
      %v464 = vadd.f32 %v208, %v224
      %v465 = vadd.f32 %v209, %v225
      %v466 = vadd.f32 %v210, %v226
      %v467 = vadd.f32 %v211, %v227
      %v468 = vadd.f32 %v212, %v228
      %v469 = vadd.f32 %v213, %v229
      %v470 = vadd.f32 %v214, %v230
      %v471 = vadd.f32 %v215, %v231
      %v472 = vadd.f32 %v216, %v232
      %v473 = vadd.f32 %v217, %v233
      %v474 = vadd.f32 %v218, %v234
      %v475 = vadd.f32 %v219, %v235
      %v476 = vadd.f32 %v220, %v236
      %v477 = vadd.f32 %v221, %v237
      %v478 = vadd.f32 %v222, %v238
      %v479 = vadd.f32 %v223, %v239
      %v480 = vmul.f32 %v448, %v464
      %v481 = vmul.f32 %v449, %v465
      %v482 = vmul.f32 %v450, %v466
      %v483 = vmul.f32 %v451, %v467
      %v484 = vmul.f32 %v452, %v468
      %v485 = vmul.f32 %v453, %v469
      %v486 = vmul.f32 %v454, %v470
      %v487 = vmul.f32 %v455, %v471
      %v488 = vmul.f32 %v456, %v472
      %v489 = vmul.f32 %v457, %v473
      %v490 = vmul.f32 %v458, %v474
      %v491 = vmul.f32 %v459, %v475
      %v492 = vmul.f32 %v460, %v476
      %v493 = vmul.f32 %v461, %v477
      %v494 = vmul.f32 %v462, %v478
      %v495 = vmul.f32 %v463, %v479
      %vm496 = vcmask 519168
      %497 = vst.msk [vmem:[%s207] sm:$0xf] %vm496, %v480
      %498 = vst.msk [vmem:[%s207 + $0x4] sm:$0xf] %vm496, %v481
      %499 = vst.msk [vmem:[%s207 + $0x8] sm:$0xf] %vm496, %v482
      %500 = vst.msk [vmem:[%s207 + $0xc] sm:$0xf] %vm496, %v483
      %501 = vst.msk [vmem:[%s207 + $0x10] sm:$0xf] %vm496, %v484
      %502 = vst.msk [vmem:[%s207 + $0x14] sm:$0xf] %vm496, %v485
      %503 = vst.msk [vmem:[%s207 + $0x18] sm:$0xf] %vm496, %v486
      %504 = vst.msk [vmem:[%s207 + $0x1c] sm:$0xf] %vm496, %v487
      %505 = vst.msk [vmem:[%s207 + $0x20] sm:$0xf] %vm496, %v488
      %506 = vst.msk [vmem:[%s207 + $0x24] sm:$0xf] %vm496, %v489
      %507 = vst.msk [vmem:[%s207 + $0x28] sm:$0xf] %vm496, %v490
      %508 = vst.msk [vmem:[%s207 + $0x2c] sm:$0xf] %vm496, %v491
      %509 = vst.msk [vmem:[%s207 + $0x30] sm:$0xf] %vm496, %v492
      %510 = vst.msk [vmem:[%s207 + $0x34] sm:$0xf] %vm496, %v493
      %511 = vst.msk [vmem:[%s207 + $0x38] sm:$0xf] %vm496, %v494
      %512 = vst.msk [vmem:[%s207 + $0x3c] sm:$0xf] %vm496, %v495
      %p513 = scmp.lt.s32.totalorder %s14, 1
      %s514 = scalar_select %p513, %s14, 1
      %s515 = smul.addr %s514, 16
      %s516 = smul.addr %s515, 4
      %s517 = scalar_lea.vmem %s3, %s516
      // Predicated region
      $region33: #{attention_spatiotemporal_block.3} parent=31 // pred_check
        %p518 = pneg %p110
      $region34: #{attention_spatiotemporal_block.3} parent=31 // pred_check_branch
        %520 = sbr.rel (%p518) target = $region36
      $region35: #{attention_spatiotemporal_block.3} parent=31 // pred_region
        _
      $region36: #{attention_spatiotemporal_block.3} parent=31 // pred_fallthru
        _
    $region32: #{attention_spatiotemporal_block.3} parent=5 // pred_fallthru
      _
    %p521 = scmp.le.s32.totalorder 2, %s9
    // Predicated region
    $region37: #{attention_spatiotemporal_block.3} parent=5 // pred_check
      %p522 = pneg %p521
    $region38: #{attention_spatiotemporal_block.3} parent=5 // pred_check_branch
      %524 = sbr.rel (%p522) target = $region40
    $region39: #{attention_spatiotemporal_block.3} parent=5 // pred_region
      %s525 = ssub.s32 %s9, 2
      // Predicated region
      $region41: #{attention_spatiotemporal_block.3} parent=39 // pred_check
        %p526 = pneg %p116
      $region42: #{attention_spatiotemporal_block.3} parent=39 // pred_check_branch
        %528 = sbr.rel (%p526) target = $region44
      $region43: #{attention_spatiotemporal_block.3} parent=39 // pred_region
        %p529 = scmp.lt.s32.totalorder %s15, 1
        %s530 = scalar_select %p529, %s15, 1
        %s531 = smul.addr %s530, 16
        %s532 = smul.addr %s531, 4
        %s533 = scalar_lea.vmem %s3, %s532
      $region44: #{attention_spatiotemporal_block.3} parent=39 // pred_fallthru
        _
    $region40: #{attention_spatiotemporal_block.3} parent=5 // pred_fallthru
      _
  $region6: #{attention_spatiotemporal_block.3} parent=0 // loop_footer
    %s13 = sadd.s32 1, %s9
  $region7: #{attention_spatiotemporal_block.3} parent=0 // loop_footer_branch
    %8 = sbr.rel target = $region3
  $region8: #{attention_spatiotemporal_block.3} parent=0 // loop_exit
    _

</llo_original>
